<compile_context>
chip_gen: v7x
topology: tpu7x:2x2x1
jax: 0.10.0
libtpu: 0.0.40
codegen_flags: <defaults>
</compile_context>

<pallas_src>
import functools

import jax
import jax.numpy as jnp
from jax.experimental import pallas as pl
from jax.experimental.pallas import tpu as pltpu

LANES = 128
MAX_ROW_TILE = 2048      # (2048, 128) f32 = 1 MiB per input block -> fits v5e/v6e/v7x VMEM budgets
NUM_SPLITS = 2           # leading "parallel" grid axis (v7x megacore); harmless on 1-TC chips


def _focal_kernel(pred_ref, label_ref, out_ref, acc_ref, *,
                  alpha, gamma, total_count, row_tile, inner_tiles, needs_mask):
    s = pl.program_id(0)          # core split
    i = pl.program_id(1)          # tile within split (reduction axis)

    @pl.when(i == 0)
    def _():
        acc_ref[...] = jnp.zeros_like(acc_ref)

    x = pred_ref[...].astype(jnp.float32)
    y = label_ref[...].astype(jnp.float32)

    # Numerically stable BCE-with-logits, sharing exp(-|x|) with the sigmoid:
    #   ce = max(x, 0) - x*y + log1p(exp(-|x|))
    #   p  = sigmoid(x) = 1/(1+e)   (x >= 0)   or   e/(1+e)   (x < 0)
    e = jnp.exp(-jnp.abs(x))
    ce = jnp.maximum(x, 0.0) - x * y + jnp.log1p(e)
    inv = 1.0 / (1.0 + e)
    p = jnp.where(x >= 0.0, inv, e * inv)

    p_t = p * y + (1.0 - p) * (1.0 - y)
    one_minus_pt = jnp.maximum(1.0 - p_t, 0.0)   # clamp: guards pow against rounding past 1.0
    if gamma == 2.0:
        modulator = jnp.square(one_minus_pt)
    elif gamma == 1.0:
        modulator = one_minus_pt
    elif gamma == 0.0:
        modulator = jnp.ones_like(one_minus_pt)
    else:
        modulator = one_minus_pt ** gamma
    loss = ce * modulator

    if alpha >= 0.0:
        alpha_t = alpha * y + (1.0 - alpha) * (1.0 - y)
        loss = alpha_t * loss

    if needs_mask:
        # Validity of the padded tail, computed from the flat element index
        # (replaces the old full-size mask HBM stream).
        tile = s * inner_tiles + i
        base = tile * (row_tile * LANES)
        row_io = jax.lax.broadcasted_iota(jnp.int32, (row_tile, LANES), 0)
        lane_io = jax.lax.broadcasted_iota(jnp.int32, (row_tile, LANES), 1)
        idx = base + row_io * LANES + lane_io
        loss = jnp.where(idx < total_count, loss, 0.0)

    # Fold the whole tile into a single-vreg accumulator.  The reshape keeps
    # the (8, 128) tile layout intact, so the sum over the leading axis is
    # plain VPU adds (no XLU reduce, no tile-sized read-modify-write).
    acc_ref[...] += loss.reshape(row_tile // 8, 8, LANES).sum(axis=0)

    @pl.when(i == pl.num_programs(1) - 1)
    def _():
        out_ref[0] = acc_ref[...]


def sigmoid_focal_loss_pallas(pred, label, alpha=-1.0, gamma=2.0, reduction="mean"):
    if reduction not in ("mean", "sum"):
        # TODO(synk): reduction='none' needs a full-size output; not used by the module.
        raise NotImplementedError("only 'mean' and 'sum' reductions supported")
    assert pred.shape == label.shape

    total_count = int(pred.size)
    rows_needed = -(-total_count // LANES)
    row_tile = min(MAX_ROW_TILE, ((rows_needed + 7) // 8) * 8)

    num_tiles = -(-rows_needed // row_tile)
    num_splits = NUM_SPLITS if num_tiles >= NUM_SPLITS else 1
    num_tiles = ((num_tiles + num_splits - 1) // num_splits) * num_splits
    inner_tiles = num_tiles // num_splits

    rows_padded = num_tiles * row_tile
    padded = rows_padded * LANES
    pad = padded - total_count

    # Keep native dtype (e.g. bf16 stays bf16) -> fewer HBM bytes; widen in-kernel.
    pred2d = jnp.pad(pred.reshape(-1), (0, pad)).reshape(rows_padded, LANES)
    label2d = jnp.pad(label.reshape(-1), (0, pad)).reshape(rows_padded, LANES)

    kernel = functools.partial(
        _focal_kernel,
        alpha=float(alpha),
        gamma=float(gamma),
        total_count=total_count,
        row_tile=row_tile,
        inner_tiles=inner_tiles,
        needs_mask=(pad > 0),
    )

    in_spec = pl.BlockSpec((row_tile, LANES), lambda s, i: (s * inner_tiles + i, 0))

    partials = pl.pallas_call(
        kernel,
        out_shape=jax.ShapeDtypeStruct((num_splits, 8, LANES), jnp.float32),
        grid=(num_splits, inner_tiles),
        in_specs=[in_spec, in_spec],
        out_specs=pl.BlockSpec((1, 8, LANES), lambda s, i: (s, 0, 0)),
        scratch_shapes=[pltpu.VMEM((8, LANES), jnp.float32)],
        compiler_params=pltpu.CompilerParams(
            dimension_semantics=("parallel", "arbitrary")),
    )(pred2d, label2d)

    total = jnp.sum(partials)
    if reduction == "mean":
        total = total / jnp.float32(total_count)
    return total


def _reference_focal_loss(pred, label, alpha=-1.0, gamma=2.0, reduction="mean"):
    x = pred.astype(jnp.float32)
    y = label.astype(jnp.float32)
    p = jax.nn.sigmoid(x)
    ce = jnp.maximum(x, 0.0) - x * y + jnp.log1p(jnp.exp(-jnp.abs(x)))
    p_t = p * y + (1 - p) * (1 - y)
    loss = ce * (1 - p_t) ** gamma
    if alpha >= 0:
        alpha_t = alpha * y + (1 - alpha) * (1 - y)
        loss = alpha_t * loss
    return jnp.mean(loss) if reduction == "mean" else jnp.sum(loss)


if __name__ == "__main__":
    key = jax.random.PRNGKey(0)
    k1, k2, k3, k4 = jax.random.split(key, 4)

    # NCHW inputs, as the PyTorch module would receive from a conv head.
    pred = jax.random.normal(k1, (2, 4, 16, 16), dtype=jnp.float32) * 2.0
    label = (jax.random.uniform(k2, (2, 4, 16, 16)) > 0.5).astype(jnp.float32)

    # Module defaults: alpha=-1.0, gamma=2.0, reduction='mean'
    out = sigmoid_focal_loss_pallas(pred, label, alpha=-1.0, gamma=2.0,
                                    reduction="mean")
    out = jax.block_until_ready(out)
    ref = _reference_focal_loss(pred, label, alpha=-1.0, gamma=2.0,
                                reduction="mean")
    assert jnp.allclose(out, ref, rtol=1e-5, atol=1e-6), (out, ref)

    # Odd shape: exercises the in-kernel padded-tail mask, alpha weighting,
    # and the 'sum' reduction.
    pred2 = jax.random.normal(k3, (2, 3, 15, 17), dtype=jnp.float32) * 2.0
    label2 = (jax.random.uniform(k4, (2, 3, 15, 17)) > 0.5).astype(jnp.float32)
    out2 = sigmoid_focal_loss_pallas(pred2, label2, alpha=0.25, gamma=2.0,
                                     reduction="sum")
    out2 = jax.block_until_ready(out2)
    ref2 = _reference_focal_loss(pred2, label2, alpha=0.25, gamma=2.0,
                                 reduction="sum")
    assert jnp.allclose(out2, ref2, rtol=1e-4, atol=1e-4), (out2, ref2)

    print("KERNEL_OK")
</pallas_src>

<mosaic_0001>
module attributes {stable_mosaic.version = 11 : i64} {
  func.func @_focal_kernel(%arg0: i32, %arg1: i32, %arg2: memref<16x128xf32, #tpu.memory_space<vmem>>, %arg3: memref<16x128xf32, #tpu.memory_space<vmem>>, %arg4: memref<1x8x128xf32, #tpu.memory_space<vmem>>, %arg5: memref<8x128xf32, #tpu.memory_space<vmem>>) attributes {dimension_semantics = [#tpu.dimension_semantics<parallel>, #tpu.dimension_semantics<arbitrary>], iteration_bounds = array<i64: 1, 1>, scalar_prefetch = 0 : i64, scratch_operands = 1 : i64, tpu.core_type = #tpu.core_type<tc>, window_params = [{transform_indices = @transform_0, window_bounds = array<i64: 16, 128>}, {transform_indices = @transform_1, window_bounds = array<i64: 16, 128>}, {transform_indices = @transform_2, window_bounds = array<i64: 1, 8, 128>}]} {
    %c0_i32 = arith.constant 0 : i32
    %0 = arith.cmpi eq, %arg1, %c0_i32 : i32
    %1 = arith.extui %0 : i1 to i32
    %c0_i32_0 = arith.constant 0 : i32
    %2 = arith.cmpi ne, %1, %c0_i32_0 : i32
    scf.if %2 {
      %cst_19 = arith.constant 0.000000e+00 : f32
      %44 = vector.broadcast %cst_19 : f32 to vector<8x128xf32>
      %c0_20 = arith.constant 0 : index
      %c0_21 = arith.constant 0 : index
      %45 = vector.load %arg5[%c0_20, %c0_21] : memref<8x128xf32, #tpu.memory_space<vmem>>, vector<8x128xf32>
      tpu.vector_store %arg5[%c0_20, %c0_21], %44 {strides = array<i32>} : memref<8x128xf32, #tpu.memory_space<vmem>>, vector<8x128xf32>,
    } else {
    }
    %c0 = arith.constant 0 : index
    %c0_1 = arith.constant 0 : index
    %3 = vector.load %arg2[%c0, %c0_1] : memref<16x128xf32, #tpu.memory_space<vmem>>, vector<16x128xf32>
    %c0_2 = arith.constant 0 : index
    %c0_3 = arith.constant 0 : index
    %4 = vector.load %arg3[%c0_2, %c0_3] : memref<16x128xf32, #tpu.memory_space<vmem>>, vector<16x128xf32>
    %5 = math.absf %3 : vector<16x128xf32>
    %cst = arith.constant 0.000000e+00 : f32
    %6 = vector.broadcast %cst : f32 to vector<16x128xf32>
    %7 = arith.subf %6, %5 : vector<16x128xf32>
    %8 = math.exp %7 : vector<16x128xf32>
    %cst_4 = arith.constant 0.000000e+00 : f32
    %9 = vector.broadcast %cst_4 : f32 to vector<16x128xf32>
    %10 = arith.maximumf %3, %9 : vector<16x128xf32>
    %11 = arith.mulf %3, %4 : vector<16x128xf32>
    %12 = arith.subf %10, %11 : vector<16x128xf32>
    %13 = math.log1p %8 : vector<16x128xf32>
    %14 = arith.addf %12, %13 : vector<16x128xf32>
    %cst_5 = arith.constant 1.000000e+00 : f32
    %15 = vector.broadcast %cst_5 : f32 to vector<16x128xf32>
    %16 = arith.addf %15, %8 : vector<16x128xf32>
    %cst_6 = arith.constant 1.000000e+00 : f32
    %17 = vector.broadcast %cst_6 : f32 to vector<16x128xf32>
    %18 = arith.divf %17, %16 : vector<16x128xf32>
    %cst_7 = arith.constant 0.000000e+00 : f32
    %19 = vector.broadcast %cst_7 : f32 to vector<16x128xf32>
    %20 = arith.cmpf oge, %3, %19 : vector<16x128xf32>
    %21 = arith.mulf %8, %18 : vector<16x128xf32>
    %22 = arith.select %20, %18, %21 : vector<16x128xi1>, vector<16x128xf32>
    %23 = arith.mulf %22, %4 : vector<16x128xf32>
    %cst_8 = arith.constant 1.000000e+00 : f32
    %24 = vector.broadcast %cst_8 : f32 to vector<16x128xf32>
    %25 = arith.subf %24, %22 : vector<16x128xf32>
    %cst_9 = arith.constant 1.000000e+00 : f32
    %26 = vector.broadcast %cst_9 : f32 to vector<16x128xf32>
    %27 = arith.subf %26, %4 : vector<16x128xf32>
    %28 = arith.mulf %25, %27 : vector<16x128xf32>
    %29 = arith.addf %23, %28 : vector<16x128xf32>
    %cst_10 = arith.constant 1.000000e+00 : f32
    %30 = vector.broadcast %cst_10 : f32 to vector<16x128xf32>
    %31 = arith.subf %30, %29 : vector<16x128xf32>
    %cst_11 = arith.constant 0.000000e+00 : f32
    %32 = vector.broadcast %cst_11 : f32 to vector<16x128xf32>
    %33 = arith.maximumf %31, %32 : vector<16x128xf32>
    %34 = arith.mulf %33, %33 : vector<16x128xf32>
    %35 = arith.mulf %14, %34 : vector<16x128xf32>
    %c0_12 = arith.constant 0 : index
    %c0_13 = arith.constant 0 : index
    %36 = vector.load %arg5[%c0_12, %c0_13] : memref<8x128xf32, #tpu.memory_space<vmem>>, vector<8x128xf32>
    %37 = vector.shape_cast %35 : vector<16x128xf32> to vector<2x8x128xf32>
    %cst_14 = arith.constant dense<0.000000e+00> : vector<8x128xf32>
    %38 = vector.multi_reduction <add>, %37, %cst_14 [0] : vector<2x8x128xf32> to vector<8x128xf32>
    %39 = arith.addf %36, %38 : vector<8x128xf32>
    %c0_15 = arith.constant 0 : index
    %c0_16 = arith.constant 0 : index
    %40 = vector.load %arg5[%c0_15, %c0_16] : memref<8x128xf32, #tpu.memory_space<vmem>>, vector<8x128xf32>
    tpu.vector_store %arg5[%c0_15, %c0_16], %39 {strides = array<i32>} : memref<8x128xf32, #tpu.memory_space<vmem>>, vector<8x128xf32>,
    %c0_i32_17 = arith.constant 0 : i32
    %41 = arith.cmpi eq, %arg1, %c0_i32_17 : i32
    %42 = arith.extui %41 : i1 to i32
    %c0_i32_18 = arith.constant 0 : i32
    %43 = arith.cmpi ne, %42, %c0_i32_18 : i32
    scf.if %43 {
      %c0_19 = arith.constant 0 : index
      %c0_20 = arith.constant 0 : index
      %44 = vector.load %arg5[%c0_19, %c0_20] : memref<8x128xf32, #tpu.memory_space<vmem>>, vector<8x128xf32>
      %c0_21 = arith.constant 0 : index
      %c0_22 = arith.constant 0 : index
      %c0_23 = arith.constant 0 : index
      %45 = vector.load %arg4[%c0_21, %c0_22, %c0_23] : memref<1x8x128xf32, #tpu.memory_space<vmem>>, vector<1x8x128xf32>
      %46 = vector.shape_cast %45 : vector<1x8x128xf32> to vector<8x128xf32>
      %47 = vector.shape_cast %44 : vector<8x128xf32> to vector<1x8x128xf32>
      tpu.vector_store %arg4[%c0_21, %c0_22, %c0_23], %47 {strides = array<i32>} : memref<1x8x128xf32, #tpu.memory_space<vmem>>, vector<1x8x128xf32>,
    } else {
    }
    return
  }
  func.func @transform_0(%arg0: i32, %arg1: i32) -> (i32, i32) {
    %c1_i32 = arith.constant 1 : i32
    %0 = arith.muli %arg0, %c1_i32 : i32
    %1 = arith.addi %0, %arg1 : i32
    %c0_i32 = arith.constant 0 : i32
    %c0_i32_0 = arith.constant 0 : i32
    return %1, %c0_i32 : i32, i32
  }
  func.func @transform_1(%arg0: i32, %arg1: i32) -> (i32, i32) {
    %c1_i32 = arith.constant 1 : i32
    %0 = arith.muli %arg0, %c1_i32 : i32
    %1 = arith.addi %0, %arg1 : i32
    %c0_i32 = arith.constant 0 : i32
    %c0_i32_0 = arith.constant 0 : i32
    return %1, %c0_i32 : i32, i32
  }
  func.func @transform_2(%arg0: i32, %arg1: i32) -> (i32, i32, i32) {
    %c0_i32 = arith.constant 0 : i32
    %c0_i32_0 = arith.constant 0 : i32
    %c0_i32_1 = arith.constant 0 : i32
    return %arg0, %c0_i32, %c0_i32_0 : i32, i32, i32
  }
}

</mosaic_0001>

<llo_original>
// kernel: tpu_custom_call.1
$region0: #{tpu_custom_call.1}
  #allocation0 [shape = 'u32[]', space=smem, size = 0x4, offset = 0x4, fixed_abs, tag = 'smem constant byte address 0x4 - core index']
  #allocation1 [shape = 'u32[144,128]{1,0:T(1,128)}', space=vmem, size = 0x12000, scoped, tag = 'internal scratch']
  #allocation2 [shape = 'f32[8,128]{1,0:T(8,128)}', space=vmem, size = 0x1000, scoped, tag = 'scratch operand']
  %s0 = inlined_call_operand.hbm [shape: f32[16,128], index: 0, kind: input, shape index: {}]
  %s1 = inlined_call_operand.hbm [shape: f32[16,128], index: 1, kind: input, shape index: {}]
  %s2 = inlined_call_operand.hbm [shape: f32[1,8,128], index: 2, kind: output, shape index: {}]
  %s3 = sld [smem:[#allocation0]]
  $region34: #{tpu_custom_call.1} parent=0
    _
  %s5 = ssub.s32 1, %s3
  %s6 = scalar_select 0, %s5, %s3
  $region1: #{tpu_custom_call.1} parent=0
    #allocation3 [shape = 'u8[8192]{0}', space=vmem, size = 0x2000, scoped, tag = 'input window, operand 0, single buffered']
    #allocation4 [shape = 's32[1]{0}', space=sflag, size = 0x4, scoped, tag = 'scoped memory for tpu_custom_call.1']
    #allocation5 [shape = 's32[1]{0}', space=sflag, size = 0x4, scoped, tag = 'scoped memory for tpu_custom_call.1']
    #allocation6 [shape = 'u8[8192]{0}', space=vmem, size = 0x2000, scoped, tag = 'input window, operand 1, single buffered']
    #allocation7 [shape = 's32[1]{0}', space=sflag, size = 0x4, scoped, tag = 'scoped memory for tpu_custom_call.1']
    #allocation8 [shape = 'u8[4096]{0}', space=vmem, size = 0x1000, scoped, tag = 'output window, operand 0, single buffered']
    %7 = vsyncpa [#allocation4], 0
    %8 = vsyncpa [#allocation7], 0
    %9 = vsyncpa [#allocation5], 0
    // Predicated region
    $region2: #{tpu_custom_call.1} parent=1 // pred_check
      _
    $region3: #{tpu_custom_call.1} parent=1 // pred_check_branch
      %11 = sbr.rel (0) target = $region5
    $region4: #{tpu_custom_call.1} parent=1 // pred_region
      %s12 = sadd.s32 0, 0
      %s13 = smul.u32 2, %s12
      %s15 = ssub.s32 256, 256
      %16 = vsyncadd [#allocation4], %s15
      %s17 = smul.addr %s13, 128
      %s18 = scalar_lea.hbm %s0, %s17
      %s19 = sshll.u32 [#allocation3], 4
      %s20 = int_to_ptr.vmem [resolvable:$true] %s19
      %25 = dma.hbm_to_vmem [thread:$0]  %s18, 256, %s20, [#allocation4], 128, 128, 8
    $region5: #{tpu_custom_call.1} parent=1 // pred_fallthru
      _
    // Predicated region
    $region6: #{tpu_custom_call.1} parent=1 // pred_check
      _
    $region7: #{tpu_custom_call.1} parent=1 // pred_check_branch
      %27 = sbr.rel (0) target = $region9
    $region8: #{tpu_custom_call.1} parent=1 // pred_region
      %s28 = sadd.s32 0, 0
      %s29 = smul.u32 2, %s28
      %s31 = ssub.s32 256, 256
      %32 = vsyncadd [#allocation7], %s31
      %s33 = smul.addr %s29, 128
      %s34 = scalar_lea.hbm %s1, %s33
      %s35 = sshll.u32 [#allocation6], 4
      %s36 = int_to_ptr.vmem [resolvable:$true] %s35
      %41 = dma.hbm_to_vmem [thread:$0]  %s34, 256, %s36, [#allocation7], 128, 128, 8
    $region9: #{tpu_custom_call.1} parent=1 // pred_fallthru
      _
    // Predicated region
    $region10: #{tpu_custom_call.1} parent=1 // pred_check
      _
    $region11: #{tpu_custom_call.1} parent=1 // pred_check_branch
      %43 = sbr.rel (0) target = $region13
    $region12: #{tpu_custom_call.1} parent=1 // pred_region
      %44 = dma.done [#allocation4], 256
    $region13: #{tpu_custom_call.1} parent=1 // pred_fallthru
      _
    // Predicated region
    $region14: #{tpu_custom_call.1} parent=1 // pred_check
      _
    $region15: #{tpu_custom_call.1} parent=1 // pred_check_branch
      %46 = sbr.rel (0) target = $region17
    $region16: #{tpu_custom_call.1} parent=1 // pred_region
      %47 = dma.done [#allocation7], 256
    $region17: #{tpu_custom_call.1} parent=1 // pred_fallthru
      _
    %s48 = sadd.s32 0, 0
    %s49 = smul.u32 2, %s48
    %s50 = sadd.s32 0, 0
    %s51 = smul.u32 2, %s50
    %p52 = scmp.eq.s32.totalorder 0, 0
    // Predicated region
    $region18: #{tpu_custom_call.1} parent=1 // pred_check
      %p53 = pneg %p52
    $region19: #{tpu_custom_call.1} parent=1 // pred_check_branch
      %55 = sbr.rel (%p53) target = $region21
    $region20: #{tpu_custom_call.1} parent=1 // pred_region
      %56 = vst [vmem:[#allocation2] sm:$0xff] 0.0
    $region21: #{tpu_custom_call.1} parent=1 // pred_fallthru
      _
    %v57 = vld [vmem:[#allocation3] sm:$0xff]
    %v58 = vld [vmem:[#allocation3 + $0x8] sm:$0xff]
    %v59 = vld [vmem:[#allocation6] sm:$0xff]
    %v60 = vld [vmem:[#allocation6 + $0x8] sm:$0xff]
    %v61 = vand.u32 2147483647, %v57
    %v62 = vand.u32 2147483647, %v58
    %v63 = vsub.f32 0.0, %v61
    %v64 = vsub.f32 0.0, %v62
    %v65 = vmul.f32 %v63, 1.442695
    %v66 = vpow.pop %v65
    %v67 = vmul.f32 %v64, 1.442695
    %v68 = vpow.pop %v67
    %v69 = vmax.f32 %v57, 0.0
    %v70 = vmax.f32 %v58, 0.0
    %v71 = vmul.f32 %v57, %v59
    %v72 = vmul.f32 %v58, %v60
    %v73 = vsub.f32 %v69, %v71
    %v74 = vsub.f32 %v70, %v72
    %v75 = vadd.f32 %v66, 1.0
    %v76 = vlog2.pop %v75
    %v77 = vmul.f32 %v76, 0.6931472
    %v78 = vmul.f32 -0.5, %v66
    %v79 = vadd.f32 %v78, 1.0
    %v80 = vmul.f32 %v79, %v66
    %v81 = vand.u32 2147483647, %v66
    %vm82 = vcmp.lt.f32.partialorder %v81, 0.0004427343
    %v83 = vsel %vm82, %v80, %v77
    %v84 = vadd.f32 %v68, 1.0
    %v85 = vlog2.pop %v84
    %v86 = vmul.f32 %v85, 0.6931472
    %v87 = vmul.f32 -0.5, %v68
    %v88 = vadd.f32 %v87, 1.0
    %v89 = vmul.f32 %v88, %v68
    %v90 = vand.u32 2147483647, %v68
    %vm91 = vcmp.lt.f32.partialorder %v90, 0.0004427343
    %v92 = vsel %vm91, %v89, %v86
    %v93 = vadd.f32 %v73, %v83
    %v94 = vadd.f32 %v74, %v92
    %v95 = vadd.f32 %v66, 1.0
    %v96 = vadd.f32 %v68, 1.0
    %v97 = vrcp.pop %v95
    %v98 = vmul.f32 1.0, %v97
    %v99 = vrcp.pop %v96
    %v100 = vmul.f32 1.0, %v99
    %vm101 = vcmp.ge.f32.partialorder %v57, 0.0
    %vm102 = vcmp.ge.f32.partialorder %v58, 0.0
    %v103 = vmul.f32 %v66, %v98
    %v104 = vmul.f32 %v68, %v100
    %v105 = vsel %vm101, %v98, %v103
    %v106 = vsel %vm102, %v100, %v104
    %v107 = vmul.f32 %v105, %v59
    %v108 = vmul.f32 %v106, %v60
    %v109 = vsub.f32 1.0, %v105
    %v110 = vsub.f32 1.0, %v106
    %v111 = vsub.f32 1.0, %v59
    %v112 = vsub.f32 1.0, %v60
    %v113 = vmul.f32 %v109, %v111
    %v114 = vmul.f32 %v110, %v112
    %v115 = vadd.f32 %v107, %v113
    %v116 = vadd.f32 %v108, %v114
    %v117 = vsub.f32 1.0, %v115
    %v118 = vsub.f32 1.0, %v116
    %v119 = vmax.f32 %v117, 0.0
    %v120 = vmax.f32 %v118, 0.0
    %v121 = vmul.f32 %v119, %v119
    %v122 = vmul.f32 %v120, %v120
    %v123 = vmul.f32 %v93, %v121
    %v124 = vmul.f32 %v94, %v122
    %v125 = vld [vmem:[#allocation2] sm:$0xff]
    %v126 = vadd.f32 %v123, %v124
    %v127 = vadd.f32 %v125, %v126
    %128 = vst [vmem:[#allocation2] sm:$0xff] %v127
    // Predicated region
    $region22: #{tpu_custom_call.1} parent=1 // pred_check
      %p129 = pneg %p52
    $region23: #{tpu_custom_call.1} parent=1 // pred_check_branch
      %131 = sbr.rel (%p129) target = $region25
    $region24: #{tpu_custom_call.1} parent=1 // pred_region
      %v132 = vld [vmem:[#allocation2] sm:$0xff]
      %133 = vst [vmem:[#allocation8] sm:$0xff] %v132
    $region25: #{tpu_custom_call.1} parent=1 // pred_fallthru
      _
    // Predicated region
    $region26: #{tpu_custom_call.1} parent=1 // pred_check
      _
    $region27: #{tpu_custom_call.1} parent=1 // pred_check_branch
      %135 = sbr.rel (0) target = $region29
    $region28: #{tpu_custom_call.1} parent=1 // pred_region
      %s137 = ssub.s32 128, 128
      %138 = vsyncadd [#allocation5], %s137
      %s140 = sshll.u32 [#allocation8], 4
      %s141 = int_to_ptr.vmem [resolvable:$true] %s140
      %143 = dma.vmem_to_hbm [thread:$0]  %s141, 128, %s2, [#allocation5]
    $region29: #{tpu_custom_call.1} parent=1 // pred_fallthru
      _
    // Predicated region
    $region30: #{tpu_custom_call.1} parent=1 // pred_check
      _
    $region31: #{tpu_custom_call.1} parent=1 // pred_check_branch
      %145 = sbr.rel (0) target = $region33
    $region32: #{tpu_custom_call.1} parent=1 // pred_region
      %146 = dma.done [#allocation5], 128
    $region33: #{tpu_custom_call.1} parent=1 // pred_fallthru
      _
    %147 = vsyncpa [#allocation4], 1
    %148 = vsyncpa [#allocation7], 1
    %149 = vsyncpa [#allocation5], 1

</llo_original>
